<compile_context>
chip_gen: v7x
topology: tpu7x:2x2x1
jax: 0.10.0
libtpu: 0.0.40
codegen_flags: <defaults>
</compile_context>

<pallas_src>
import jax
import jax.numpy as jnp
from jax.experimental import pallas as pl
from jax.experimental.pallas import tpu as pltpu


_LANE = 128
_SUBLANE = 8


def _round_up(n, m):
    return ((n + m - 1) // m) * m


def _cdiv(a, b):
    return (a + b - 1) // b


def _encoder_kernel(x_ref, w1_ref, w2_ref, o_ref):
    # x_ref : (TB, L*C)   f32  -- raw activations; channel mean folded into w1
    # w1_ref: (L*C, H)    bf16
    # w2_ref: (H, E_pad)  bf16 (zero-padded to a lane-dense width)
    # o_ref : (TB, E)     f32  -- only the real expert columns are written back
    x = x_ref[...].astype(w1_ref.dtype)                    # VPU cast, hidden under DMA
    h = jnp.dot(x, w1_ref[...],
                preferred_element_type=jnp.float32)        # MXU, f32 accumulate
    h = jnp.maximum(h, 0.0)                                # ReLU on the VPU
    out = jnp.dot(h.astype(w2_ref.dtype), w2_ref[...],
                  preferred_element_type=jnp.float32)      # MXU, f32 accumulate
    e = o_ref.shape[-1]
    o_ref[...] = out[:, :e]                                # drop the zero-padded experts


def _choose_batch_tile(B, K, E):
    """Rows per grid step.

    Big tiles amortize per-grid-step overhead; cap so the double-buffered f32
    activation tile stays well inside v5e's 16 MiB scoped-VMEM default; keep
    >= 2 grid steps once the batch is large enough so the 'parallel' axis can
    shard across v7x's two TensorCores.
    """
    budget = 8 * 1024 * 1024                       # conservative VMEM budget
    per_row = 2 * 4 * (K + E)                      # x + out rows, f32, double-buffered
    cap = max(_SUBLANE, min(4096, (budget // per_row) // _SUBLANE * _SUBLANE))
    steps = _cdiv(B, cap)
    if steps == 1 and B >= 1024:
        steps = 2                                  # keep both v7x TCs busy
    if steps == 1:
        return B, 1                                # single block == full dim (always legal)
    tb = _round_up(_cdiv(B, steps), _SUBLANE)
    return tb, _cdiv(B, tb)


def encoder_forward(x, w1, w2, *, compute_dtype=jnp.bfloat16):
    """DUET distributional router encoder forward.

    x : (B, seq_len, n_vars) f32
    w1: (hidden, seq_len)     f32  -- torch Linear(seq_len -> hidden).weight
    w2: (num_experts, hidden) f32  -- torch Linear(hidden -> num_experts).weight
    returns (B, num_experts) f32
    """
    B, L, C = x.shape
    H, L1 = w1.shape
    E, H2 = w2.shape
    assert L1 == L and H2 == H
    K = L * C

    # ---- weight prep (tiny; fuses into one small op under jit; precompute
    # once out-of-line when the weights are static) -------------------------
    # mean(x)[b, l] @ w1.T == x.reshape(B, L*C) @ w1_exp,
    # with w1_exp[l*C + c, :] = w1[:, l] / C.  Scale in f32 before the bf16 cast.
    w1_exp = jnp.repeat(w1.astype(jnp.float32).T / jnp.float32(C), C, axis=0)
    w1_exp = w1_exp.astype(compute_dtype)                         # (K, H)
    E_pad = _round_up(E, _LANE)                                   # lane-dense MXU RHS
    w2_pad = jnp.zeros((H, E_pad), jnp.float32).at[:, :E].set(
        w2.astype(jnp.float32).T).astype(compute_dtype)           # (H, E_pad)

    # ---- activations: reshape only (free under jit); no cast / pad passes --
    x2 = x.reshape(B, K)

    TB, steps = _choose_batch_tile(B, K, E)

    out = pl.pallas_call(
        _encoder_kernel,
        out_shape=jax.ShapeDtypeStruct((B, E), jnp.float32),
        grid=(steps,),
        in_specs=[
            pl.BlockSpec((TB, K), lambda i: (i, 0)),       # batch-tiled activations
            pl.BlockSpec((K, H), lambda i: (0, 0)),        # weights stay VMEM-resident
            pl.BlockSpec((H, E_pad), lambda i: (0, 0)),
        ],
        out_specs=pl.BlockSpec((TB, E), lambda i: (i, 0)), # unpadded, low write traffic
        compiler_params=pltpu.CompilerParams(
            dimension_semantics=("parallel",)),
    )(x2, w1_exp, w2_pad)

    return out


def reference_forward(x, w1, w2):
    mean = jnp.mean(x, axis=-1)                 # (B, L)
    h = jnp.maximum(mean @ w1.T, 0.0)           # (B, H)
    return h @ w2.T                             # (B, E)


if __name__ == "__main__":
    # config: seq_len=8, hidden_size=32, num_experts=4; batch=2, n_vars=4
    B, L, C = 2, 8, 4
    H, E = 32, 4

    key = jax.random.PRNGKey(0)
    kx, k1, k2 = jax.random.split(key, 3)

    x = jax.random.normal(kx, (B, L, C), dtype=jnp.float32)
    # torch Linear weights are (out_features, in_features)
    w1 = jax.random.normal(k1, (H, L), dtype=jnp.float32) * 0.1
    w2 = jax.random.normal(k2, (E, H), dtype=jnp.float32) * 0.1

    fwd = jax.jit(encoder_forward)
    out = jax.block_until_ready(fwd(x, w1, w2))

    ref = reference_forward(x, w1, w2)
    assert out.shape == (B, E)
    # bf16 matmul operands with f32 accumulation vs. pure-f32 reference.
    assert jnp.allclose(out, ref, atol=5e-3, rtol=5e-2), float(
        jnp.max(jnp.abs(out - ref)))

    print("KERNEL_OK")
</pallas_src>

<mosaic_0001>
module attributes {stable_mosaic.version = 11 : i64} {
  func.func @_encoder_kernel(%arg0: i32, %arg1: memref<2x32xf32, #tpu.memory_space<vmem>>, %arg2: memref<32x32xbf16, #tpu.memory_space<vmem>>, %arg3: memref<32x128xbf16, #tpu.memory_space<vmem>>, %arg4: memref<2x4xf32, #tpu.memory_space<vmem>>) attributes {dimension_semantics = [#tpu.dimension_semantics<parallel>], iteration_bounds = array<i64: 1>, scalar_prefetch = 0 : i64, scratch_operands = 0 : i64, tpu.core_type = #tpu.core_type<tc>, window_params = [{transform_indices = @transform_0, window_bounds = array<i64: 2, 32>}, {pipeline_mode = #tpu.pipeline_mode<synchronous>, transform_indices = @transform_1, window_bounds = array<i64: 32, 32>}, {pipeline_mode = #tpu.pipeline_mode<synchronous>, transform_indices = @transform_2, window_bounds = array<i64: 32, 128>}, {transform_indices = @transform_3, window_bounds = array<i64: 2, 4>}]} {
    %c0 = arith.constant 0 : index
    %c0_0 = arith.constant 0 : index
    %0 = vector.load %arg1[%c0, %c0_0] : memref<2x32xf32, #tpu.memory_space<vmem>>, vector<2x32xf32>
    %1 = arith.truncf %0 : vector<2x32xf32> to vector<2x32xbf16>
    %c0_1 = arith.constant 0 : index
    %c0_2 = arith.constant 0 : index
    %2 = vector.load %arg2[%c0_1, %c0_2] : memref<32x32xbf16, #tpu.memory_space<vmem>>, vector<32x32xbf16>
    %cst = arith.constant dense<0.000000e+00> : vector<2x32xf32>
    %3 = tpu.matmul %1, %2, %cst {dimension_numbers = #tpu.dot_dimension_numbers<[1], [0], [0], [1], [0, 0, 1, 1], [], []>} : vector<2x32xbf16>, vector<32x32xbf16>, vector<2x32xf32> -> vector<2x32xf32>
    %cst_3 = arith.constant 0.000000e+00 : f32
    %4 = vector.broadcast %cst_3 : f32 to vector<2x32xf32>
    %5 = arith.maximumf %3, %4 : vector<2x32xf32>
    %6 = arith.truncf %5 : vector<2x32xf32> to vector<2x32xbf16>
    %c0_4 = arith.constant 0 : index
    %c0_5 = arith.constant 0 : index
    %7 = vector.load %arg3[%c0_4, %c0_5] : memref<32x128xbf16, #tpu.memory_space<vmem>>, vector<32x128xbf16>
    %cst_6 = arith.constant dense<0.000000e+00> : vector<2x128xf32>
    %8 = tpu.matmul %6, %7, %cst_6 {dimension_numbers = #tpu.dot_dimension_numbers<[1], [0], [0], [1], [0, 0, 1, 1], [], []>} : vector<2x32xbf16>, vector<32x128xbf16>, vector<2x128xf32> -> vector<2x128xf32>
    %9 = vector.extract_strided_slice %8 {offsets = [0, 0], sizes = [2, 4], strides = [1, 1]} : vector<2x128xf32> to vector<2x4xf32>
    %c0_7 = arith.constant 0 : index
    %c0_8 = arith.constant 0 : index
    %10 = vector.load %arg4[%c0_7, %c0_8] : memref<2x4xf32, #tpu.memory_space<vmem>>, vector<2x4xf32>
    tpu.vector_store %arg4[%c0_7, %c0_8], %9 {strides = array<i32>} : memref<2x4xf32, #tpu.memory_space<vmem>>, vector<2x4xf32>,
    return
  }
  func.func @transform_0(%arg0: i32) -> (i32, i32) {
    %c0_i32 = arith.constant 0 : i32
    %c0_i32_0 = arith.constant 0 : i32
    return %arg0, %c0_i32 : i32, i32
  }
  func.func @transform_1(%arg0: i32) -> (i32, i32) {
    %c0_i32 = arith.constant 0 : i32
    %c0_i32_0 = arith.constant 0 : i32
    %c0_i32_1 = arith.constant 0 : i32
    return %c0_i32, %c0_i32_0 : i32, i32
  }
  func.func @transform_2(%arg0: i32) -> (i32, i32) {
    %c0_i32 = arith.constant 0 : i32
    %c0_i32_0 = arith.constant 0 : i32
    %c0_i32_1 = arith.constant 0 : i32
    return %c0_i32, %c0_i32_0 : i32, i32
  }
  func.func @transform_3(%arg0: i32) -> (i32, i32) {
    %c0_i32 = arith.constant 0 : i32
    %c0_i32_0 = arith.constant 0 : i32
    return %arg0, %c0_i32 : i32, i32
  }
}

</mosaic_0001>

<llo_original>
// kernel: encoder_forward.1
$region0: #{encoder_forward.1}
  #allocation0 [shape = 'u32[]', space=smem, size = 0x4, offset = 0x4, fixed_abs, tag = 'smem constant byte address 0x4 - core index']
  #allocation1 [shape = 'u32[144,128]{1,0:T(1,128)}', space=vmem, size = 0x12000, scoped, tag = 'internal scratch']
  %s0 = inlined_call_operand.vmem [shape: f32[2,32], index: 0, kind: input, shape index: {}]
  %s1 = inlined_call_operand.vmem [shape: bf16[32,32], index: 1, kind: input, shape index: {}]
  %s2 = inlined_call_operand.vmem [shape: bf16[32,128], index: 2, kind: input, shape index: {}]
  %s3 = inlined_call_operand.hbm [shape: f32[2,4], index: 3, kind: output, shape index: {}]
  %s4 = sld [smem:[#allocation0]]
  $region22: #{encoder_forward.1} parent=0
    _
  %s6 = ssub.s32 1, %s4
  %s7 = scalar_select 0, %s6, %s4
  $region1: #{encoder_forward.1} parent=0
    #allocation2 [shape = 'u8[1024]{0}', space=vmem, size = 0x400, scoped, tag = 'output window, operand 0, single buffered']
    #allocation3 [shape = 's32[1]{0}', space=sflag, size = 0x4, scoped, tag = 'scoped memory for encoder_forward.1']
    %8 = vsyncpa [#allocation3], 0
    // Predicated region
    $region2: #{encoder_forward.1} parent=1 // pred_check
      _
    $region3: #{encoder_forward.1} parent=1 // pred_check_branch
      %10 = sbr.rel (0) target = $region5
    $region4: #{encoder_forward.1} parent=1 // pred_region
      _
    $region5: #{encoder_forward.1} parent=1 // pred_fallthru
      _
    // Predicated region
    $region6: #{encoder_forward.1} parent=1 // pred_check
      _
    $region7: #{encoder_forward.1} parent=1 // pred_check_branch
      %12 = sbr.rel (0) target = $region9
    $region8: #{encoder_forward.1} parent=1 // pred_region
      _
    $region9: #{encoder_forward.1} parent=1 // pred_fallthru
      _
    // Predicated region
    $region10: #{encoder_forward.1} parent=1 // pred_check
      _
    $region11: #{encoder_forward.1} parent=1 // pred_check_branch
      %14 = sbr.rel (0) target = $region13
    $region12: #{encoder_forward.1} parent=1 // pred_region
      _
    $region13: #{encoder_forward.1} parent=1 // pred_fallthru
      _
    %v16 = vld [vmem:[%s0] sm:$0x3]
    %v17 = vpack.c.bf16 %v16, %v16
    %v18 = vld [vmem:[%s1] sm:$0xf]
    %v19 = vld [vmem:[%s1 + $0x4] sm:$0xf]
    %v20 = vld [vmem:[%s1 + $0x8] sm:$0xf]
    %v21 = vld [vmem:[%s1 + $0xc] sm:$0xf]
    %v26 = vunpack.c.l.b16 %v18
    %v27 = vunpack.c.l.b16 %v19
    %v28 = vunpack.c.l.b16 %v20
    %v29 = vunpack.c.l.b16 %v21
    %v30 = vpack.c.b16 %v27, %v26
    %v31 = vpack.c.b16 %v29, %v28
    %vm34 = vcmask 261120
    %v36 = vsel %vm34, %v17, 0
    %38 = vmatprep.subr.bf16.mxu0 0
    %39 = vmatpush1.bf16.msra.mxu0 %v30
    %40 = vmatprep.subr.bf16.mxu0 0
    %41 = vmatpush1.bf16.msra.mxu0 %v31
    %42 = vmatprep.subr.bf16.mxu0 0
    %43 = vmatpush1.bf16.msra.mxu0 0
    %44 = vmatprep.subr.bf16.mxu0 0
    %45 = vmatpush1.bf16.msra.mxu0 0
    %46 = vmatprep.subr.bf16.mxu0 0
    %47 = vmatpush1.bf16.msra.mxu0 0
    %48 = vmatprep.subr.bf16.mxu0 0
    %49 = vmatpush1.bf16.msra.mxu0 0
    %50 = vmatprep.subr.bf16.mxu0 0
    %51 = vmatpush1.bf16.msra.mxu0 0
    %52 = vmatprep.subr.bf16.mxu0 0
    %53 = vmatpush1.bf16.msra.mxu0 0
    %54 = vmatprep.subr.bf16.mxu0 0
    %55 = vmatpush1.bf16.msra.mxu0 0
    %56 = vmatprep.subr.bf16.mxu0 0
    %57 = vmatpush1.bf16.msra.mxu0 0
    %58 = vmatprep.subr.bf16.mxu0 0
    %59 = vmatpush1.bf16.msra.mxu0 0
    %60 = vmatprep.subr.bf16.mxu0 0
    %61 = vmatpush1.bf16.msra.mxu0 0
    %62 = vmatprep.subr.bf16.mxu0 0
    %63 = vmatpush1.bf16.msra.mxu0 0
    %64 = vmatprep.subr.bf16.mxu0 0
    %65 = vmatpush1.bf16.msra.mxu0 0
    %66 = vmatprep.subr.bf16.mxu0 0
    %67 = vmatpush1.bf16.msra.mxu0 0
    %68 = vmatprep.subr.bf16.mxu0 0
    %69 = vmatpush1.bf16.msra.mxu0 0
    %70 = vmatprep.mubr.bf16.mxu0 0
    %71 = vmatmul.mubr.bf16.gmra.mrb[0].mxu0 %v36
    %v72 = vpop.f32.mrb[0].mxu0
    %v73 = vadd.f32 0.0, %v72
    %v74 = vpop.f32.mrb[0].mxu0
    %v75 = vpop.f32.mrb[0].mxu0
    %v76 = vpop.f32.mrb[0].mxu0
    %77 = vdwg.mxu0
    %v78 = vmax.f32 %v73, 0.0
    %v79 = vpack.c.bf16 %v78, %v78
    %v80 = vld [vmem:[%s2] sm:$0xf]
    %v81 = vld [vmem:[%s2 + $0x4] sm:$0xf]
    %v82 = vld [vmem:[%s2 + $0x8] sm:$0xf]
    %v83 = vld [vmem:[%s2 + $0xc] sm:$0xf]
    %v88 = vunpack.c.l.b16 %v80
    %v89 = vunpack.c.l.b16 %v81
    %v90 = vunpack.c.l.b16 %v82
    %v91 = vunpack.c.l.b16 %v83
    %v92 = vpack.c.b16 %v89, %v88
    %v93 = vpack.c.b16 %v91, %v90
    %v97 = vsel %vm34, %v79, 0
    %99 = vmatprep.subr.bf16.mxu0 0
    %100 = vmatpush1.bf16.msra.mxu0 %v92
    %101 = vmatprep.subr.bf16.mxu0 0
    %102 = vmatpush1.bf16.msra.mxu0 %v93
    %103 = vmatprep.subr.bf16.mxu0 0
    %104 = vmatpush1.bf16.msra.mxu0 0
    %105 = vmatprep.subr.bf16.mxu0 0
    %106 = vmatpush1.bf16.msra.mxu0 0
    %107 = vmatprep.subr.bf16.mxu0 0
    %108 = vmatpush1.bf16.msra.mxu0 0
    %109 = vmatprep.subr.bf16.mxu0 0
    %110 = vmatpush1.bf16.msra.mxu0 0
    %111 = vmatprep.subr.bf16.mxu0 0
    %112 = vmatpush1.bf16.msra.mxu0 0
    %113 = vmatprep.subr.bf16.mxu0 0
    %114 = vmatpush1.bf16.msra.mxu0 0
    %115 = vmatprep.subr.bf16.mxu0 0
    %116 = vmatpush1.bf16.msra.mxu0 0
    %117 = vmatprep.subr.bf16.mxu0 0
    %118 = vmatpush1.bf16.msra.mxu0 0
    %119 = vmatprep.subr.bf16.mxu0 0
    %120 = vmatpush1.bf16.msra.mxu0 0
    %121 = vmatprep.subr.bf16.mxu0 0
    %122 = vmatpush1.bf16.msra.mxu0 0
    %123 = vmatprep.subr.bf16.mxu0 0
    %124 = vmatpush1.bf16.msra.mxu0 0
    %125 = vmatprep.subr.bf16.mxu0 0
    %126 = vmatpush1.bf16.msra.mxu0 0
    %127 = vmatprep.subr.bf16.mxu0 0
    %128 = vmatpush1.bf16.msra.mxu0 0
    %129 = vmatprep.subr.bf16.mxu0 0
    %130 = vmatpush1.bf16.msra.mxu0 0
    %131 = vmatprep.mubr.bf16.mxu0 0
    %132 = vmatmul.mubr.bf16.gmra.mrb[0].mxu0 %v97
    %v133 = vpop.f32.mrb[0].mxu0
    %v134 = vadd.f32 0.0, %v133
    %v135 = vpop.f32.mrb[0].mxu0
    %v136 = vpop.f32.mrb[0].mxu0
    %v137 = vpop.f32.mrb[0].mxu0
    %138 = vdwg.mxu0
    %vm139 = vcmask 25600
    %140 = vst.msk [vmem:[#allocation2] sm:$0x3] %vm139, %v134
    // Predicated region
    $region14: #{encoder_forward.1} parent=1 // pred_check
      _
    $region15: #{encoder_forward.1} parent=1 // pred_check_branch
      %142 = sbr.rel (0) target = $region17
    $region16: #{encoder_forward.1} parent=1 // pred_region
      %s144 = ssub.s32 32, 32
      %145 = vsyncadd [#allocation3], %s144
      %s147 = sshll.u32 [#allocation2], 4
      %s148 = int_to_ptr.vmem [resolvable:$true] %s147
      %150 = dma.vmem_to_hbm [thread:$0]  %s148, 32, %s3, [#allocation3]
    $region17: #{encoder_forward.1} parent=1 // pred_fallthru
      _
    // Predicated region
    $region18: #{encoder_forward.1} parent=1 // pred_check
      _
    $region19: #{encoder_forward.1} parent=1 // pred_check_branch
      %152 = sbr.rel (0) target = $region21
    $region20: #{encoder_forward.1} parent=1 // pred_region
      %153 = dma.done [#allocation3], 32
    $region21: #{encoder_forward.1} parent=1 // pred_fallthru
      _
    %154 = vsyncpa [#allocation3], 1

</llo_original>
